<compile_context>
chip_gen: v6e
topology: v6e:2x2x1
jax: 0.10.0
libtpu: 0.0.40
codegen_flags: <defaults>
</compile_context>

<pallas_src>
import jax
import jax.numpy as jnp
from jax.experimental import pallas as pl
from jax.experimental.pallas import tpu as pltpu


def _round_up(x, m):
    return ((x + m - 1) // m) * m


def _pick_tk(D, tk_max=2048):
    """Largest K-tile that exactly divides D and is a multiple of 128, capped
    at tk_max.  Falls back to full D so the contraction dim is never ragged."""
    if D <= tk_max:
        return D
    for cand in range(tk_max, 127, -128):
        if D % cand == 0:
            return cand
    return D


def _fused_proj_kernel(x_ref, w_ref, b_ref, o_ref, acc_ref):
    # x: (tm, tk) compute dtype; w: (tk, tn) pre-transposed compute dtype;
    # b: (1, tn) f32; o: (tm, tn); acc: (tm, tn) f32 scratch.
    k = pl.program_id(2)

    @pl.when(k == 0)
    def _():
        acc_ref[...] = jnp.zeros_like(acc_ref)

    acc_ref[...] += jnp.dot(x_ref[...], w_ref[...],
                            preferred_element_type=jnp.float32)

    @pl.when(k == pl.num_programs(2) - 1)
    def _():
        o_ref[...] = (acc_ref[...] + b_ref[...]).astype(o_ref.dtype)


def _fused_matmul(x2, wt, b, *, out_dtype=None, tm=512, tn=512, tk_max=2048):
    """y = x2 @ wt + b, tiled over rows (tm), output columns (tn) and the
    contraction dim (tk)."""
    M, D = x2.shape
    D2, N = wt.shape
    assert D == D2 and b.shape == (1, N)
    out_dtype = out_dtype or x2.dtype

    # Clamp tiles for small problems; keep (8, 128) alignment.
    tm = min(tm, _round_up(M, 8))
    tn = min(tn, _round_up(N, 128))
    tk = _pick_tk(D, tk_max)

    grid_m = pl.cdiv(M, tm)
    grid_n = pl.cdiv(N, tn)
    grid_k = D // tk                      # exact by construction of tk

    in_item = jnp.dtype(x2.dtype).itemsize
    w_item = jnp.dtype(wt.dtype).itemsize
    out_item = jnp.dtype(out_dtype).itemsize

    # Grid order: put the larger operand's grid axis OUTERMOST so its tile is
    # VMEM-resident across the inner loop (full reuse when grid_k == 1).
    weight_bytes = D * N * w_item
    act_bytes = M * D * in_item
    n_outer = weight_bytes >= act_bytes

    if n_outer:                            # weight-bound: N outer, M inner
        grid = (grid_n, grid_m, grid_k)
        x_map = lambda j, i, k: (i, k)
        w_map = lambda j, i, k: (k, j)
        b_map = lambda j, i, k: (0, j)
        o_map = lambda j, i, k: (i, j)
        w_rereads = 1 if grid_k == 1 else grid_m
        x_rereads = grid_n
    else:                                  # activation-bound: M outer, N inner
        grid = (grid_m, grid_n, grid_k)
        x_map = lambda i, j, k: (i, k)
        w_map = lambda i, j, k: (k, j)
        b_map = lambda i, j, k: (0, j)
        o_map = lambda i, j, k: (i, j)
        w_rereads = grid_m
        x_rereads = 1 if grid_k == 1 else grid_n

    cost = pl.CostEstimate(
        flops=2 * M * N * D,
        transcendentals=0,
        bytes_accessed=(M * D * in_item * x_rereads
                        + D * N * w_item * w_rereads
                        + N * 4
                        + M * N * out_item),
    )

    return pl.pallas_call(
        _fused_proj_kernel,
        out_shape=jax.ShapeDtypeStruct((M, N), out_dtype),
        grid=grid,
        in_specs=[
            pl.BlockSpec((tm, tk), x_map),    # activations
            pl.BlockSpec((tk, tn), w_map),    # fused, pre-transposed weights
            pl.BlockSpec((1, tn), b_map),     # fused bias (f32)
        ],
        out_specs=pl.BlockSpec((tm, tn), o_map),
        scratch_shapes=[pltpu.VMEM((tm, tn), jnp.float32)],
        compiler_params=pltpu.CompilerParams(
            dimension_semantics=("parallel", "parallel", "arbitrary"),
            vmem_limit_bytes=48 * 1024 * 1024,   # v7x-safe; raises v5e/v6e defaults
        ),
        cost_estimate=cost,
    )(x2, wt, b)


def prepare_fused_params(params, *, compute_dtype=jnp.bfloat16):
    """One-time parameter prep (hoisted out of the forward hot path).

    Returns {'wt': (D, 3*OUT) compute_dtype, 'b': (1, 3*OUT) f32} with columns
    ordered [Q | K | V]."""
    wt = jnp.concatenate(
        [params["wq"].T, params["wk"].T, params["wv"].T], axis=1
    ).astype(compute_dtype)
    bias = jnp.concatenate(
        [params["bq"], params["bk"], params["bv"]]
    ).astype(jnp.float32).reshape(1, -1)
    return {"wt": wt, "b": bias}


def linear_projection(x, fused, c1):
    """Pallas implementation of LinearProjection.forward.

    x: (B, S, D); fused: output of prepare_fused_params.
    Returns (Q, K, V), each of shape (B, 1, S*D, c1)."""
    B, D = x.shape[0], x.shape[-1]
    out_dim = fused["wt"].shape[1] // 3

    x2 = x.reshape(-1, D).astype(fused["wt"].dtype)          # (M, D)
    y = _fused_matmul(x2, fused["wt"], fused["b"], out_dtype=x.dtype)  # (M, 3*OUT)

    # TODO(synk): optionally emit Q/K/V as three separate pallas_call outputs
    # to avoid possible post-kernel slice materialization (low priority).
    Q = y[:, :out_dim].reshape(B, 1, -1, c1)
    K = y[:, out_dim:2 * out_dim].reshape(B, 1, -1, c1)
    V = y[:, 2 * out_dim:].reshape(B, 1, -1, c1)
    return Q, K, V


def init_params(key, input_size, c1, dtype=jnp.float32):
    """Deterministic init matching nn.Linear default: U(-1/sqrt(fan_in), +)."""
    out_dim = c1 * input_size
    bound = 1.0 / (input_size ** 0.5)
    keys = jax.random.split(key, 6)
    u = lambda k, shape: jax.random.uniform(
        k, shape, dtype=dtype, minval=-bound, maxval=bound)
    return {
        "wq": u(keys[0], (out_dim, input_size)),
        "bq": u(keys[1], (out_dim,)),
        "wk": u(keys[2], (out_dim, input_size)),
        "bk": u(keys[3], (out_dim,)),
        "wv": u(keys[4], (out_dim, input_size)),
        "bv": u(keys[5], (out_dim,)),
    }


if __name__ == "__main__":
    # Small shapes: batch=2, seq=8, input_size=32, c1=4
    B, S, D, C1 = 2, 8, 32, 4

    key = jax.random.PRNGKey(0)
    k_x, k_p = jax.random.split(key)
    x = jax.random.normal(k_x, (B, S, D), dtype=jnp.float32)
    params = init_params(k_p, D, C1)

    # Plain-JAX reference of the PyTorch forward.
    def ref_proj(w, b):
        y = jnp.einsum("bsd,od->bso", x, w) + b
        return y.reshape(B, 1, -1, C1)

    Q_ref = ref_proj(params["wq"], params["bq"])
    K_ref = ref_proj(params["wk"], params["bk"])
    V_ref = ref_proj(params["wv"], params["bv"])

    # --- bf16 MXU path (default / fast): f32 accumulation, relaxed tolerance.
    fused_bf16 = prepare_fused_params(params, compute_dtype=jnp.bfloat16)
    Q, K, V = linear_projection(x, fused_bf16, C1)
    jax.block_until_ready((Q, K, V))
    assert Q.shape == (B, 1, S * D, C1)
    assert jnp.allclose(Q, Q_ref, atol=3e-2, rtol=3e-2)
    assert jnp.allclose(K, K_ref, atol=3e-2, rtol=3e-2)
    assert jnp.allclose(V, V_ref, atol=3e-2, rtol=3e-2)

    # --- exact-f32 path: tight tolerance against the reference.
    fused_f32 = prepare_fused_params(params, compute_dtype=jnp.float32)
    Qf, Kf, Vf = linear_projection(x, fused_f32, C1)
    jax.block_until_ready((Qf, Kf, Vf))
    assert jnp.allclose(Qf, Q_ref, atol=1e-5)
    assert jnp.allclose(Kf, K_ref, atol=1e-5)
    assert jnp.allclose(Vf, V_ref, atol=1e-5)

    print("KERNEL_OK")
</pallas_src>

<mosaic_0001>
module attributes {stable_mosaic.version = 11 : i64} {
  func.func @_fused_proj_kernel(%arg0: i32, %arg1: i32, %arg2: i32, %arg3: memref<16x32xbf16, #tpu.memory_space<vmem>>, %arg4: memref<32x384xbf16, #tpu.memory_space<vmem>>, %arg5: memref<1x384xf32, #tpu.memory_space<vmem>>, %arg6: memref<16x384xf32, #tpu.memory_space<vmem>>, %arg7: memref<16x384xf32, #tpu.memory_space<vmem>>) attributes {dimension_semantics = [#tpu.dimension_semantics<parallel>, #tpu.dimension_semantics<parallel>, #tpu.dimension_semantics<arbitrary>], iteration_bounds = array<i64: 1, 1, 1>, scalar_prefetch = 0 : i64, scratch_operands = 1 : i64, tpu.core_type = #tpu.core_type<tc>, window_params = [{transform_indices = @transform_0, window_bounds = array<i64: 16, 32>}, {transform_indices = @transform_1, window_bounds = array<i64: 32, 384>}, {transform_indices = @transform_2, window_bounds = array<i64: 1, 384>}, {transform_indices = @transform_3, window_bounds = array<i64: 16, 384>}]} {
    %c0_i32 = arith.constant 0 : i32
    %0 = arith.cmpi eq, %arg2, %c0_i32 : i32
    %1 = arith.extui %0 : i1 to i32
    %c0_i32_0 = arith.constant 0 : i32
    %2 = arith.cmpi ne, %1, %c0_i32_0 : i32
    scf.if %2 {
      %cst_10 = arith.constant 0.000000e+00 : f32
      %12 = vector.broadcast %cst_10 : f32 to vector<16x384xf32>
      %c0_11 = arith.constant 0 : index
      %c0_12 = arith.constant 0 : index
      %13 = vector.load %arg7[%c0_11, %c0_12] : memref<16x384xf32, #tpu.memory_space<vmem>>, vector<16x384xf32>
      tpu.vector_store %arg7[%c0_11, %c0_12], %12 {strides = array<i32>} : memref<16x384xf32, #tpu.memory_space<vmem>>, vector<16x384xf32>,
    } else {
    }
    %c0 = arith.constant 0 : index
    %c0_1 = arith.constant 0 : index
    %3 = vector.load %arg7[%c0, %c0_1] : memref<16x384xf32, #tpu.memory_space<vmem>>, vector<16x384xf32>
    %c0_2 = arith.constant 0 : index
    %c0_3 = arith.constant 0 : index
    %4 = vector.load %arg3[%c0_2, %c0_3] : memref<16x32xbf16, #tpu.memory_space<vmem>>, vector<16x32xbf16>
    %c0_4 = arith.constant 0 : index
    %c0_5 = arith.constant 0 : index
    %5 = vector.load %arg4[%c0_4, %c0_5] : memref<32x384xbf16, #tpu.memory_space<vmem>>, vector<32x384xbf16>
    %cst = arith.constant dense<0.000000e+00> : vector<16x384xf32>
    %6 = tpu.matmul %4, %5, %cst {dimension_numbers = #tpu.dot_dimension_numbers<[1], [0], [0], [1], [0, 0, 1, 1], [], []>} : vector<16x32xbf16>, vector<32x384xbf16>, vector<16x384xf32> -> vector<16x384xf32>
    %7 = arith.addf %3, %6 : vector<16x384xf32>
    %c0_6 = arith.constant 0 : index
    %c0_7 = arith.constant 0 : index
    %8 = vector.load %arg7[%c0_6, %c0_7] : memref<16x384xf32, #tpu.memory_space<vmem>>, vector<16x384xf32>
    tpu.vector_store %arg7[%c0_6, %c0_7], %7 {strides = array<i32>} : memref<16x384xf32, #tpu.memory_space<vmem>>, vector<16x384xf32>,
    %c0_i32_8 = arith.constant 0 : i32
    %9 = arith.cmpi eq, %arg2, %c0_i32_8 : i32
    %10 = arith.extui %9 : i1 to i32
    %c0_i32_9 = arith.constant 0 : i32
    %11 = arith.cmpi ne, %10, %c0_i32_9 : i32
    scf.if %11 {
      %c0_10 = arith.constant 0 : index
      %c0_11 = arith.constant 0 : index
      %12 = vector.load %arg7[%c0_10, %c0_11] : memref<16x384xf32, #tpu.memory_space<vmem>>, vector<16x384xf32>
      %c0_12 = arith.constant 0 : index
      %c0_13 = arith.constant 0 : index
      %13 = vector.load %arg5[%c0_12, %c0_13] : memref<1x384xf32, #tpu.memory_space<vmem>>, vector<1x384xf32>
      %14 = vector.broadcast %13 : vector<1x384xf32> to vector<16x384xf32>
      %15 = arith.addf %12, %14 : vector<16x384xf32>
      %c0_14 = arith.constant 0 : index
      %c0_15 = arith.constant 0 : index
      %16 = vector.load %arg6[%c0_14, %c0_15] : memref<16x384xf32, #tpu.memory_space<vmem>>, vector<16x384xf32>
      tpu.vector_store %arg6[%c0_14, %c0_15], %15 {strides = array<i32>} : memref<16x384xf32, #tpu.memory_space<vmem>>, vector<16x384xf32>,
    } else {
    }
    return
  }
  func.func @transform_0(%arg0: i32, %arg1: i32, %arg2: i32) -> (i32, i32) {
    %c0_i32 = arith.constant 0 : i32
    return %arg1, %arg2 : i32, i32
  }
  func.func @transform_1(%arg0: i32, %arg1: i32, %arg2: i32) -> (i32, i32) {
    %c0_i32 = arith.constant 0 : i32
    return %arg2, %arg0 : i32, i32
  }
  func.func @transform_2(%arg0: i32, %arg1: i32, %arg2: i32) -> (i32, i32) {
    %c0_i32 = arith.constant 0 : i32
    %c0_i32_0 = arith.constant 0 : i32
    return %c0_i32, %arg0 : i32, i32
  }
  func.func @transform_3(%arg0: i32, %arg1: i32, %arg2: i32) -> (i32, i32) {
    %c0_i32 = arith.constant 0 : i32
    return %arg1, %arg0 : i32, i32
  }
}

</mosaic_0001>

<llo_original>
// kernel: tpu_custom_call.1
$region0: #{tpu_custom_call.1}
  #allocation0 [shape = 'u32[]', space=smem, size = 0x4, offset = 0x4, fixed_abs, tag = 'smem constant byte address 0x4 - core index']
  #allocation1 [shape = 'u32[144,128]{1,0:T(1,128)}', space=vmem, size = 0x12000, scoped, tag = 'internal scratch']
  #allocation2 [shape = 'f32[16,384]{1,0:T(8,128)}', space=vmem, size = 0x6000, scoped, tag = 'scratch operand']
  %s0 = inlined_call_operand.hbm [shape: bf16[16,32], index: 0, kind: input, shape index: {}]
  %s1 = inlined_call_operand.hbm [shape: bf16[32,384], index: 1, kind: input, shape index: {}]
  %s2 = inlined_call_operand.vmem [shape: f32[1,384], index: 2, kind: input, shape index: {}]
  %s3 = inlined_call_operand.hbm [shape: f32[16,384], index: 3, kind: output, shape index: {}]
  %s4 = sld [smem:[#allocation0]]
  $region38: #{tpu_custom_call.1} parent=0
    _
  %s6 = ssub.s32 1, %s4
  %s7 = scalar_select 0, %s6, %s4
  $region1: #{tpu_custom_call.1} parent=0
    #allocation3 [shape = 'u8[4096]{0}', space=vmem, size = 0x1000, scoped, tag = 'input window, operand 0, single buffered']
    #allocation4 [shape = 's32[1]{0}', space=sflag, size = 0x4, scoped, tag = 'scoped memory for tpu_custom_call.1']
    #allocation5 [shape = 's32[1]{0}', space=sflag, size = 0x4, scoped, tag = 'scoped memory for tpu_custom_call.1']
    #allocation6 [shape = 'u8[24576]{0}', space=vmem, size = 0x6000, scoped, tag = 'input window, operand 1, single buffered']
    #allocation7 [shape = 's32[1]{0}', space=sflag, size = 0x4, scoped, tag = 'scoped memory for tpu_custom_call.1']
    #allocation8 [shape = 'u8[24576]{0}', space=vmem, size = 0x6000, scoped, tag = 'output window, operand 0, single buffered']
    %8 = vsyncpa [#allocation4], 0
    %9 = vsyncpa [#allocation7], 0
    %10 = vsyncpa [#allocation5], 0
    // Predicated region
    $region2: #{tpu_custom_call.1} parent=1 // pred_check
      _
    $region3: #{tpu_custom_call.1} parent=1 // pred_check_branch
      %12 = sbr.rel (0) target = $region5
    $region4: #{tpu_custom_call.1} parent=1 // pred_region
      %s14 = ssub.s32 128, 128
      %15 = vsyncadd [#allocation4], %s14
      %s16 = sshll.u32 [#allocation3], 4
      %s17 = int_to_ptr.vmem [resolvable:$true] %s16
      %22 = dma.hbm_to_vmem [thread:$0]  %s0, 128, %s17, [#allocation4], 64, 64, 4
    $region5: #{tpu_custom_call.1} parent=1 // pred_fallthru
      _
    // Predicated region
    $region6: #{tpu_custom_call.1} parent=1 // pred_check
      _
    $region7: #{tpu_custom_call.1} parent=1 // pred_check_branch
      %24 = sbr.rel (0) target = $region9
    $region8: #{tpu_custom_call.1} parent=1 // pred_region
      %s26 = ssub.s32 768, 768
      %27 = vsyncadd [#allocation7], %s26
      %s28 = sshll.u32 [#allocation6], 4
      %s29 = int_to_ptr.vmem [resolvable:$true] %s28
      %34 = dma.hbm_to_vmem [thread:$0]  %s1, 768, %s29, [#allocation7], 192, 192, 12
    $region9: #{tpu_custom_call.1} parent=1 // pred_fallthru
      _
    // Predicated region
    $region10: #{tpu_custom_call.1} parent=1 // pred_check
      _
    $region11: #{tpu_custom_call.1} parent=1 // pred_check_branch
      %36 = sbr.rel (0) target = $region13
    $region12: #{tpu_custom_call.1} parent=1 // pred_region
      _
    $region13: #{tpu_custom_call.1} parent=1 // pred_fallthru
      _
    // Predicated region
    $region14: #{tpu_custom_call.1} parent=1 // pred_check
      _
    $region15: #{tpu_custom_call.1} parent=1 // pred_check_branch
      %38 = sbr.rel (0) target = $region17
    $region16: #{tpu_custom_call.1} parent=1 // pred_region
      %39 = dma.done [#allocation4], 128
    $region17: #{tpu_custom_call.1} parent=1 // pred_fallthru
      _
    // Predicated region
    $region18: #{tpu_custom_call.1} parent=1 // pred_check
      _
    $region19: #{tpu_custom_call.1} parent=1 // pred_check_branch
      %41 = sbr.rel (0) target = $region21
    $region20: #{tpu_custom_call.1} parent=1 // pred_region
      %42 = dma.done [#allocation7], 768
    $region21: #{tpu_custom_call.1} parent=1 // pred_fallthru
      _
    %p44 = scmp.eq.s32.totalorder 0, 0
    // Predicated region
    $region22: #{tpu_custom_call.1} parent=1 // pred_check
      %p45 = pneg %p44
    $region23: #{tpu_custom_call.1} parent=1 // pred_check_branch
      %47 = sbr.rel (%p45) target = $region25
    $region24: #{tpu_custom_call.1} parent=1 // pred_region
      %48 = vst [vmem:[#allocation2] sm:$0xff] 0.0
      %49 = vst [vmem:[#allocation2 + $0x8] sm:$0xff] 0.0
      %50 = vst [vmem:[#allocation2 + $0x10] sm:$0xff] 0.0
      %51 = vst [vmem:[#allocation2 + $0x18] sm:$0xff] 0.0
      %52 = vst [vmem:[#allocation2 + $0x20] sm:$0xff] 0.0
      %53 = vst [vmem:[#allocation2 + $0x28] sm:$0xff] 0.0
    $region25: #{tpu_custom_call.1} parent=1 // pred_fallthru
      _
    %v54 = vld [vmem:[#allocation2] sm:$0xff]
    %v55 = vld [vmem:[#allocation2 + $0x8] sm:$0xff]
    %v56 = vld [vmem:[#allocation2 + $0x10] sm:$0xff]
    %v57 = vld [vmem:[#allocation2 + $0x18] sm:$0xff]
    %v58 = vld [vmem:[#allocation2 + $0x20] sm:$0xff]
    %v59 = vld [vmem:[#allocation2 + $0x28] sm:$0xff]
    %v60 = vld [vmem:[#allocation3] sm:$0xf]
    %v61 = vld [vmem:[#allocation3 + $0x4] sm:$0xf]
    %v62 = vld [vmem:[#allocation6] sm:$0xff]
    %v63 = vld [vmem:[#allocation6 + $0x8] sm:$0xf]
    %v64 = vld [vmem:[#allocation6 + $0xc] sm:$0xff]
    %v65 = vld [vmem:[#allocation6 + $0x14] sm:$0xf]
    %v66 = vld [vmem:[#allocation6 + $0x18] sm:$0xff]
    %v67 = vld [vmem:[#allocation6 + $0x20] sm:$0xf]
    %v68 = vld [vmem:[#allocation6 + $0x24] sm:$0xff]
    %v69 = vld [vmem:[#allocation6 + $0x2c] sm:$0xf]
    %v72 = vunpack.c.l.b16 %v60
    %v73 = vunpack.c.l.b16 %v61
    %v74 = vpack.c.b16 %v73, %v72
    %v83 = vunpack.c.l.b16 %v62
    %v84 = vunpack.c.h.b16 %v62
    %v85 = vunpack.c.l.b16 %v63
    %v86 = vunpack.c.l.b16 %v64
    %v87 = vunpack.c.h.b16 %v64
    %v88 = vunpack.c.l.b16 %v65
    %v89 = vunpack.c.l.b16 %v66
    %v90 = vunpack.c.h.b16 %v66
    %v91 = vunpack.c.l.b16 %v67
    %v92 = vunpack.c.l.b16 %v68
    %v93 = vunpack.c.h.b16 %v68
    %v94 = vunpack.c.l.b16 %v69
    %v95 = vpack.c.b16 %v86, %v83
    %v96 = vpack.c.b16 %v87, %v84
    %v97 = vpack.c.b16 %v88, %v85
    %v98 = vpack.c.b16 %v92, %v89
    %v99 = vpack.c.b16 %v93, %v90
    %v100 = vpack.c.b16 %v94, %v91
    %vm107 = vcmask 261120
    %v109 = vsel %vm107, %v74, 0
    %111 = vmatprep.subr.bf16.mxu0 0
    %112 = vmatpush1.bf16.msra.mxu0 0
    %113 = vmatprep.subr.bf16.mxu0 0
    %114 = vmatpush1.bf16.msra.mxu0 0
    %115 = vmatprep.subr.bf16.mxu0 0
    %116 = vmatpush1.bf16.msra.mxu0 0
    %117 = vmatprep.subr.bf16.mxu0 0
    %118 = vmatpush1.bf16.msra.mxu0 0
    %119 = vmatprep.subr.bf16.mxu0 0
    %120 = vmatpush1.bf16.msra.mxu0 0
    %121 = vmatprep.subr.bf16.mxu0 0
    %122 = vmatpush1.bf16.msra.mxu0 0
    %123 = vmatprep.subr.bf16.mxu0 %v99
    %124 = vmatpush1.bf16.msra.mxu0 %v98
    %125 = vmatprep.subr.bf16.mxu0 %v96
    %126 = vmatpush1.bf16.msra.mxu0 %v95
    %127 = vmatprep.subr.bf16.mxu0 0
    %128 = vmatpush2.bf16.msra.mxu0 0
    %129 = vmatprep.subr.bf16.mxu0 0
    %130 = vmatpush2.bf16.msra.mxu0 0
    %131 = vmatprep.subr.bf16.mxu0 0
    %132 = vmatpush2.bf16.msra.mxu0 0
    %133 = vmatprep.subr.bf16.mxu0 0
    %134 = vmatpush2.bf16.msra.mxu0 0
    %135 = vmatprep.subr.bf16.mxu0 0
    %136 = vmatpush2.bf16.msra.mxu0 0
    %137 = vmatprep.subr.bf16.mxu0 0
    %138 = vmatpush2.bf16.msra.mxu0 0
    %139 = vmatprep.subr.bf16.mxu0 0
    %140 = vmatpush2.bf16.msra.mxu0 0
    %141 = vmatprep.subr.bf16.mxu0 0
    %142 = vmatpush2.bf16.msra.mxu0 0
    %143 = vmatprep.mubr.bf16.mxu0 0
    %144 = vmatmul.mubr.bf16.gmra.mxu0 %v109
    %v145 = vpop.f32.mrf.mxu0
    %v146 = vadd.f32 0.0, %v145
    %v147 = vpop.f32.mrf.mxu0
    %v148 = vadd.f32 0.0, %v147
    %v149 = vpop.f32.mrf.mxu0
    %v150 = vadd.f32 0.0, %v149
    %v151 = vpop.f32.mrf.mxu0
    %v152 = vadd.f32 0.0, %v151
    %153 = vdwg.mxu0
    %154 = vmatprep.subr.bf16.mxu0 0
    %155 = vmatpush1.bf16.msra.mxu0 0
    %156 = vmatprep.subr.bf16.mxu0 0
    %157 = vmatpush1.bf16.msra.mxu0 0
    %158 = vmatprep.subr.bf16.mxu0 0
    %159 = vmatpush1.bf16.msra.mxu0 0
    %160 = vmatprep.subr.bf16.mxu0 0
    %161 = vmatpush1.bf16.msra.mxu0 0
    %162 = vmatprep.subr.bf16.mxu0 0
    %163 = vmatpush1.bf16.msra.mxu0 0
    %164 = vmatprep.subr.bf16.mxu0 0
    %165 = vmatpush1.bf16.msra.mxu0 0
    %166 = vmatprep.subr.bf16.mxu0 0
    %167 = vmatpush1.bf16.msra.mxu0 %v100
    %168 = vmatprep.subr.bf16.mxu0 0
    %169 = vmatpush1.bf16.msra.mxu0 %v97
    %170 = vmatprep.subr.bf16.mxu0 0
    %171 = vmatpush2.bf16.msra.mxu0 0
    %172 = vmatprep.subr.bf16.mxu0 0
    %173 = vmatpush2.bf16.msra.mxu0 0
    %174 = vmatprep.subr.bf16.mxu0 0
    %175 = vmatpush2.bf16.msra.mxu0 0
    %176 = vmatprep.subr.bf16.mxu0 0
    %177 = vmatpush2.bf16.msra.mxu0 0
    %178 = vmatprep.subr.bf16.mxu0 0
    %179 = vmatpush2.bf16.msra.mxu0 0
    %180 = vmatprep.subr.bf16.mxu0 0
    %181 = vmatpush2.bf16.msra.mxu0 0
    %182 = vmatprep.subr.bf16.mxu0 0
    %183 = vmatpush2.bf16.msra.mxu0 0
    %184 = vmatprep.subr.bf16.mxu0 0
    %185 = vmatpush2.bf16.msra.mxu0 0
    %186 = vmatprep.mubr.bf16.mxu0 0
    %187 = vmatmul.mubr.bf16.gmra.mxu0 %v109
    %v188 = vpop.f32.mrf.mxu0
    %v189 = vadd.f32 0.0, %v188
    %v190 = vpop.f32.mrf.mxu0
    %v191 = vpop.f32.mrf.mxu0
    %v192 = vadd.f32 0.0, %v191
    %v193 = vpop.f32.mrf.mxu0
    %194 = vdwg.mxu0
    %v195 = vadd.f32 %v54, %v146
    %v196 = vadd.f32 %v55, %v148
    %v197 = vadd.f32 %v56, %v189
    %v198 = vadd.f32 %v57, %v150
    %v199 = vadd.f32 %v58, %v152
    %v200 = vadd.f32 %v59, %v192
    %201 = vst [vmem:[#allocation2] sm:$0xff] %v195
    %202 = vst [vmem:[#allocation2 + $0x8] sm:$0xff] %v196
    %203 = vst [vmem:[#allocation2 + $0x10] sm:$0xff] %v197
    %204 = vst [vmem:[#allocation2 + $0x18] sm:$0xff] %v198
    %205 = vst [vmem:[#allocation2 + $0x20] sm:$0xff] %v199
    %206 = vst [vmem:[#allocation2 + $0x28] sm:$0xff] %v200
    // Predicated region
    $region26: #{tpu_custom_call.1} parent=1 // pred_check
      %p207 = pneg %p44
    $region27: #{tpu_custom_call.1} parent=1 // pred_check_branch
      %209 = sbr.rel (%p207) target = $region29
    $region28: #{tpu_custom_call.1} parent=1 // pred_region
      %v210 = vld [vmem:[#allocation2] sm:$0xff]
      %v211 = vld [vmem:[#allocation2 + $0x8] sm:$0xff]
      %v212 = vld [vmem:[#allocation2 + $0x10] sm:$0xff]
      %v213 = vld [vmem:[#allocation2 + $0x18] sm:$0xff]
      %v214 = vld [vmem:[#allocation2 + $0x20] sm:$0xff]
      %v215 = vld [vmem:[#allocation2 + $0x28] sm:$0xff]
      %v216 = vld [vmem:[%s2] sm:$0x7]
      %v218 = vlaneseq
      %v219 = vshrl.u32 %v218, 7
      %v220 = vsub.s32 0, %v219
      %v221 = vrot.slane %v216, %v220
      %v222 = vlaneseq
      %v223 = vshrl.u32 %v222, 7
      %v224 = vsub.s32 1, %v223
      %v225 = vrot.slane %v216, %v224
      %v226 = vlaneseq
      %v227 = vshrl.u32 %v226, 7
      %v228 = vsub.s32 2, %v227
      %v229 = vrot.slane %v216, %v228
      %v233 = vadd.f32 %v210, %v221
      %v234 = vadd.f32 %v211, %v225
      %v235 = vadd.f32 %v212, %v229
      %v236 = vadd.f32 %v213, %v221
      %v237 = vadd.f32 %v214, %v225
      %v238 = vadd.f32 %v215, %v229
      %239 = vst [vmem:[#allocation8] sm:$0xff] %v233
      %240 = vst [vmem:[#allocation8 + $0x8] sm:$0xff] %v234
      %241 = vst [vmem:[#allocation8 + $0x10] sm:$0xff] %v235
      %242 = vst [vmem:[#allocation8 + $0x18] sm:$0xff] %v236
      %243 = vst [vmem:[#allocation8 + $0x20] sm:$0xff] %v237
      %244 = vst [vmem:[#allocation8 + $0x28] sm:$0xff] %v238
    $region29: #{tpu_custom_call.1} parent=1 // pred_fallthru
      _
    // Predicated region
    $region30: #{tpu_custom_call.1} parent=1 // pred_check
      _
    $region31: #{tpu_custom_call.1} parent=1 // pred_check_branch
      %246 = sbr.rel (0) target = $region33
    $region32: #{tpu_custom_call.1} parent=1 // pred_region
      %s248 = ssub.s32 768, 768
      %249 = vsyncadd [#allocation5], %s248
      %s250 = sshll.u32 [#allocation8], 4
      %s251 = int_to_ptr.vmem [resolvable:$true] %s250
      %256 = dma.vmem_to_hbm [thread:$0]  %s251, 768, %s3, [#allocation5], 384, 384, 24
    $region33: #{tpu_custom_call.1} parent=1 // pred_fallthru
      _
    // Predicated region
    $region34: #{tpu_custom_call.1} parent=1 // pred_check
      _
    $region35: #{tpu_custom_call.1} parent=1 // pred_check_branch
      %258 = sbr.rel (0) target = $region37
    $region36: #{tpu_custom_call.1} parent=1 // pred_region
      %259 = dma.done [#allocation5], 768
    $region37: #{tpu_custom_call.1} parent=1 // pred_fallthru
      _
    %260 = vsyncpa [#allocation4], 1
    %261 = vsyncpa [#allocation7], 1
    %262 = vsyncpa [#allocation5], 1

</llo_original>
